<compile_context>
chip_gen: v7x
topology: tpu7x:2x2x1
jax: 0.10.0
libtpu: 0.0.40
codegen_flags: <defaults>
</compile_context>

<pallas_src>
import functools
import math

import jax
import jax.numpy as jnp
from jax.experimental import pallas as pl
from jax.experimental.pallas import tpu as pltpu


# ----------------------------------------------------------------------------
# PE buffer construction (matches PositionalEncoding.__init__)
# ----------------------------------------------------------------------------
def build_pe_table(dim, max_len=5000):
    position = jnp.arange(0, max_len, dtype=jnp.float32)[:, None]            # [max_len, 1]
    div_term = jnp.exp(
        jnp.arange(0, dim, 2, dtype=jnp.float32) * -(math.log(10000.0) / dim)
    )                                                                         # [dim//2]
    pe = jnp.zeros((max_len, dim), dtype=jnp.float32)
    pe = pe.at[:, 0::2].set(jnp.sin(position * div_term))
    pe = pe.at[:, 1::2].set(jnp.cos(position * div_term))
    return pe[None, :, :]                                                     # [1, max_len, dim] f32


# ----------------------------------------------------------------------------
# Kernels
# ----------------------------------------------------------------------------
def _pe_add_seq_kernel(emb_ref, pe_ref, o_ref, *, scale):
    # emb: [TB, TC] (emb dtype), pe: [1, TC] f32 (broadcast over batch), o: [TB, TC]
    acc = emb_ref[...].astype(jnp.float32) * scale + pe_ref[...]
    o_ref[...] = acc.astype(o_ref.dtype)


def _pe_add_step_kernel(emb_ref, pe_ref, o_ref, *, scale):
    # emb: [TB, L, D], pe: [1, 1, D] f32 (broadcast over batch and seq in-kernel), o: [TB, L, D]
    acc = emb_ref[...].astype(jnp.float32) * scale + pe_ref[...]
    o_ref[...] = acc.astype(o_ref.dtype)


# ----------------------------------------------------------------------------
# Tile-size helpers (keep blocks small enough for v7x's 64 MiB VMEM, aligned to
# sublane/lane packing; fall back to full dim when it doesn't divide cleanly).
# ----------------------------------------------------------------------------
def _pick_rows(n, target=512, align=8):
    if n <= target:
        return n
    t = max(align, (target // align) * align)
    return t if n % t == 0 else n


def _pick_lanes(n, target=2048, align=128):
    if n <= target:
        return n
    t = max(align, (target // align) * align)
    return t if n % t == 0 else n


# ----------------------------------------------------------------------------
# Forward wrapper (eval mode; dropout = identity)
# ----------------------------------------------------------------------------
def positional_encoding_forward(pe, emb, step=None):
    """pe: [1, max_len, D] f32 buffer;  emb: [B, L, D];  step: optional static int.

    Mirrors PyTorch `if step:` truthiness — step=0 takes the full-slice path.
    """
    B, L, D = emb.shape
    scale = float(math.sqrt(D))
    pe = pe.astype(jnp.float32)

    if step:
        # --- decode-step path: single PE row added to every (b, l) position ---
        pe_row = pe[:, step, :][:, None, :]                                   # [1, 1, D] f32
        tb = _pick_rows(B)
        out = pl.pallas_call(
            functools.partial(_pe_add_step_kernel, scale=scale),
            out_shape=jax.ShapeDtypeStruct((B, L, D), emb.dtype),
            grid=(pl.cdiv(B, tb),),
            in_specs=[
                pl.BlockSpec((tb, L, D), lambda b: (b, 0, 0)),
                pl.BlockSpec((1, 1, D), lambda b: (0, 0, 0)),   # constant block -> fetched once
            ],
            out_specs=pl.BlockSpec((tb, L, D), lambda b: (b, 0, 0)),
            compiler_params=pltpu.CompilerParams(dimension_semantics=("parallel",)),
        )(emb, pe_row)
        return out

    # --- main path: out = emb*scale + pe[:, :L] ---
    # Flatten seq*dim onto the lane axis -> lane-dense loads/stores.
    emb2d = emb.reshape(B, L * D)
    pe2d = pe[0, :L].reshape(1, L * D)                                        # [1, L*D] f32

    tb = _pick_rows(B)
    tc = _pick_lanes(L * D)
    # Grid: (seq_chunks, batch_chunks); batch innermost so the PE block index is unchanged
    # across batch tiles and Pallas elides its re-fetch.
    grid = (pl.cdiv(L * D, tc), pl.cdiv(B, tb))

    out2d = pl.pallas_call(
        functools.partial(_pe_add_seq_kernel, scale=scale),
        out_shape=jax.ShapeDtypeStruct((B, L * D), emb.dtype),
        grid=grid,
        in_specs=[
            pl.BlockSpec((tb, tc), lambda c, b: (b, c)),
            pl.BlockSpec((1, tc), lambda c, b: (0, c)),        # independent of batch index
        ],
        out_specs=pl.BlockSpec((tb, tc), lambda c, b: (b, c)),
        compiler_params=pltpu.CompilerParams(
            dimension_semantics=("parallel", "parallel"),
        ),
    )(emb2d, pe2d)

    # dropout -> identity in eval mode
    return out2d.reshape(B, L, D)


# ----------------------------------------------------------------------------
# Pure-JAX reference (mirrors the PyTorch forward, eval mode)
# ----------------------------------------------------------------------------
def reference_forward(pe, emb, step=None):
    out = emb.astype(jnp.float32) * math.sqrt(emb.shape[-1])
    if step:
        out = out + pe[:, step][:, None, :]
    else:
        out = out + pe[:, : emb.shape[1]]
    return out.astype(emb.dtype)


# ----------------------------------------------------------------------------
# Main
# ----------------------------------------------------------------------------
if __name__ == "__main__":
    batch = 2
    seq_len = 8
    dim = 32
    max_len = 5000

    key = jax.random.PRNGKey(0)
    pe = build_pe_table(dim, max_len=max_len)
    emb = jax.random.normal(key, (batch, seq_len, dim), jnp.float32)

    # --- main path (step=None) ---
    out = positional_encoding_forward(pe, emb, step=None)
    out = jax.block_until_ready(out)
    ref = reference_forward(pe, emb, step=None)
    assert out.shape == (batch, seq_len, dim)
    assert jnp.allclose(out, ref, atol=1e-5, rtol=1e-5), "mismatch vs reference (step=None)"

    # --- decode-step path (step truthy) ---
    step = 3
    out_step = positional_encoding_forward(pe, emb, step=step)
    out_step = jax.block_until_ready(out_step)
    ref_step = reference_forward(pe, emb, step=step)
    assert jnp.allclose(out_step, ref_step, atol=1e-5, rtol=1e-5), "mismatch vs reference (step)"

    print("KERNEL_OK")
</pallas_src>

<mosaic_0001>
module attributes {stable_mosaic.version = 11 : i64} {
  func.func @_pe_add_seq_kernel(%arg0: i32, %arg1: i32, %arg2: memref<2x256xf32, #tpu.memory_space<vmem>>, %arg3: memref<1x256xf32, #tpu.memory_space<vmem>>, %arg4: memref<2x256xf32, #tpu.memory_space<vmem>>) attributes {dimension_semantics = [#tpu.dimension_semantics<parallel>, #tpu.dimension_semantics<parallel>], iteration_bounds = array<i64: 1, 1>, scalar_prefetch = 0 : i64, scratch_operands = 0 : i64, tpu.core_type = #tpu.core_type<tc>, window_params = [{transform_indices = @transform_0, window_bounds = array<i64: 2, 256>}, {transform_indices = @transform_1, window_bounds = array<i64: 1, 256>}, {transform_indices = @transform_2, window_bounds = array<i64: 2, 256>}]} {
    %c0 = arith.constant 0 : index
    %c0_0 = arith.constant 0 : index
    %0 = vector.load %arg2[%c0, %c0_0] : memref<2x256xf32, #tpu.memory_space<vmem>>, vector<2x256xf32>
    %cst = arith.constant 5.65685415 : f32
    %1 = vector.broadcast %cst : f32 to vector<2x256xf32>
    %2 = arith.mulf %0, %1 : vector<2x256xf32>
    %c0_1 = arith.constant 0 : index
    %c0_2 = arith.constant 0 : index
    %3 = vector.load %arg3[%c0_1, %c0_2] : memref<1x256xf32, #tpu.memory_space<vmem>>, vector<1x256xf32>
    %4 = vector.broadcast %3 : vector<1x256xf32> to vector<2x256xf32>
    %5 = arith.addf %2, %4 : vector<2x256xf32>
    %c0_3 = arith.constant 0 : index
    %c0_4 = arith.constant 0 : index
    %6 = vector.load %arg4[%c0_3, %c0_4] : memref<2x256xf32, #tpu.memory_space<vmem>>, vector<2x256xf32>
    tpu.vector_store %arg4[%c0_3, %c0_4], %5 {strides = array<i32>} : memref<2x256xf32, #tpu.memory_space<vmem>>, vector<2x256xf32>,
    return
  }
  func.func @transform_0(%arg0: i32, %arg1: i32) -> (i32, i32) {
    %c0_i32 = arith.constant 0 : i32
    return %arg1, %arg0 : i32, i32
  }
  func.func @transform_1(%arg0: i32, %arg1: i32) -> (i32, i32) {
    %c0_i32 = arith.constant 0 : i32
    %c0_i32_0 = arith.constant 0 : i32
    return %c0_i32, %arg0 : i32, i32
  }
  func.func @transform_2(%arg0: i32, %arg1: i32) -> (i32, i32) {
    %c0_i32 = arith.constant 0 : i32
    return %arg1, %arg0 : i32, i32
  }
}

</mosaic_0001>

<llo_original>
// kernel: tpu_custom_call.1
$region0: #{tpu_custom_call.1}
  #allocation0 [shape = 'u32[]', space=smem, size = 0x4, offset = 0x4, fixed_abs, tag = 'smem constant byte address 0x4 - core index']
  #allocation1 [shape = 'u32[144,128]{1,0:T(1,128)}', space=vmem, size = 0x12000, scoped, tag = 'internal scratch']
  %s0 = inlined_call_operand.hbm [shape: f32[2,256], index: 0, kind: input, shape index: {}]
  %s1 = inlined_call_operand.vmem [shape: f32[1,256], index: 1, kind: input, shape index: {}]
  %s2 = inlined_call_operand.hbm [shape: f32[2,256], index: 2, kind: output, shape index: {}]
  %s3 = sld [smem:[#allocation0]]
  $region22: #{tpu_custom_call.1} parent=0
    _
  %s5 = ssub.s32 1, %s3
  %s6 = scalar_select 0, %s5, %s3
  $region1: #{tpu_custom_call.1} parent=0
    #allocation2 [shape = 'u8[2048]{0}', space=vmem, size = 0x800, scoped, tag = 'input window, operand 0, single buffered']
    #allocation3 [shape = 's32[1]{0}', space=sflag, size = 0x4, scoped, tag = 'scoped memory for tpu_custom_call.1']
    #allocation4 [shape = 's32[1]{0}', space=sflag, size = 0x4, scoped, tag = 'scoped memory for tpu_custom_call.1']
    #allocation5 [shape = 'u8[2048]{0}', space=vmem, size = 0x800, scoped, tag = 'output window, operand 0, single buffered']
    %7 = vsyncpa [#allocation3], 0
    %8 = vsyncpa [#allocation4], 0
    // Predicated region
    $region2: #{tpu_custom_call.1} parent=1 // pred_check
      _
    $region3: #{tpu_custom_call.1} parent=1 // pred_check_branch
      %10 = sbr.rel (0) target = $region5
    $region4: #{tpu_custom_call.1} parent=1 // pred_region
      %s12 = ssub.s32 64, 64
      %13 = vsyncadd [#allocation3], %s12
      %s15 = sshll.u32 [#allocation2], 4
      %s16 = int_to_ptr.vmem [resolvable:$true] %s15
      %18 = dma.hbm_to_vmem [thread:$0]  %s0, 64, %s16, [#allocation3]
    $region5: #{tpu_custom_call.1} parent=1 // pred_fallthru
      _
    // Predicated region
    $region6: #{tpu_custom_call.1} parent=1 // pred_check
      _
    $region7: #{tpu_custom_call.1} parent=1 // pred_check_branch
      %20 = sbr.rel (0) target = $region9
    $region8: #{tpu_custom_call.1} parent=1 // pred_region
      _
    $region9: #{tpu_custom_call.1} parent=1 // pred_fallthru
      _
    // Predicated region
    $region10: #{tpu_custom_call.1} parent=1 // pred_check
      _
    $region11: #{tpu_custom_call.1} parent=1 // pred_check_branch
      %22 = sbr.rel (0) target = $region13
    $region12: #{tpu_custom_call.1} parent=1 // pred_region
      %23 = dma.done [#allocation3], 64
    $region13: #{tpu_custom_call.1} parent=1 // pred_fallthru
      _
    %v24 = vld [vmem:[#allocation2] sm:$0xf]
    %v25 = vmul.f32 %v24, 5.656854
    %v26 = vld [vmem:[%s1] sm:$0x3]
    %v28 = vlaneseq
    %v29 = vshrl.u32 %v28, 7
    %v30 = vsub.s32 0, %v29
    %v31 = vrot.slane %v26, %v30
    %v32 = vlaneseq
    %v33 = vshrl.u32 %v32, 7
    %v34 = vsub.s32 1, %v33
    %v35 = vrot.slane %v26, %v34
    %v36 = vcombine.low %v31, %v35
    %v38 = vunpack.c.l.s4 1983009808
    %v39 = vunpack.c.0.s8 %v38
    %v40 = vlaneseq
    %v41 = vshrl.u32 %v40, 7
    %v42 = vsub.s32 %v39, %v41
    %v43 = vrot.slane %v36, %v42
    %v45 = vadd.f32 %v25, %v43
    %46 = vst [vmem:[#allocation5] sm:$0xf] %v45
    // Predicated region
    $region14: #{tpu_custom_call.1} parent=1 // pred_check
      _
    $region15: #{tpu_custom_call.1} parent=1 // pred_check_branch
      %48 = sbr.rel (0) target = $region17
    $region16: #{tpu_custom_call.1} parent=1 // pred_region
      %s50 = ssub.s32 64, 64
      %51 = vsyncadd [#allocation4], %s50
      %s53 = sshll.u32 [#allocation5], 4
      %s54 = int_to_ptr.vmem [resolvable:$true] %s53
      %56 = dma.vmem_to_hbm [thread:$0]  %s54, 64, %s2, [#allocation4]
    $region17: #{tpu_custom_call.1} parent=1 // pred_fallthru
      _
    // Predicated region
    $region18: #{tpu_custom_call.1} parent=1 // pred_check
      _
    $region19: #{tpu_custom_call.1} parent=1 // pred_check_branch
      %58 = sbr.rel (0) target = $region21
    $region20: #{tpu_custom_call.1} parent=1 // pred_region
      %59 = dma.done [#allocation4], 64
    $region21: #{tpu_custom_call.1} parent=1 // pred_fallthru
      _
    %60 = vsyncpa [#allocation3], 1
    %61 = vsyncpa [#allocation4], 1

</llo_original>
